<compile_context>
chip_gen: v5e
topology: v5e:2x2
jax: 0.10.0
libtpu: 0.0.40
codegen_flags: <defaults>
</compile_context>

<pallas_src>
import functools

import numpy as np

import jax
import jax.numpy as jnp
from jax.experimental import pallas as pl
from jax.experimental.pallas import tpu as pltpu


def _focal_loss_kernel(logits_ref, tgt_ref, out_ref, acc_ref, *,
                       gamma, neg_alpha, hw, tile_cols, chunk, n_chunks,
                       ragged):
    j = pl.program_id(2)
    s = pl.program_id(1)
    n_j = pl.num_programs(2)
    n_classes = logits_ref.shape[0]

    @pl.when(j == 0)
    def _():
        acc_ref[...] = jnp.zeros_like(acc_ref)

    # Hoisted loop-invariant iotas (JAX does not CSE broadcasts in the loop).
    cls = jax.lax.broadcasted_iota(jnp.int32, (n_classes, chunk), 0)
    if ragged:
        base = (s * n_j + j) * tile_cols
        col = jax.lax.broadcasted_iota(jnp.int32, (1, chunk), 1)

    all_alpha_equal = all(a == neg_alpha[0] for a in neg_alpha)
    g = float(gamma)

    def chunk_body(c, carry):
        if isinstance(c, int):
            off = c * chunk
        else:
            off = pl.multiple_of(c * chunk, chunk)

        x = logits_ref[:, pl.ds(off, chunk)].astype(jnp.float32)   # (C, CH)
        t = tgt_ref[:, pl.ds(off, chunk)]                          # (1, CH)

        # softmax pieces along the class (sublane) axis.
        m = jnp.max(x, axis=0, keepdims=True)                      # (1, CH)
        e = jnp.exp(x - m)                                         # (C, CH)
        sum_e = jnp.sum(e, axis=0, keepdims=True)                  # (1, CH)

        # Gather at the target class via select + sublane reduce (no one-hot).
        sel = cls == t                                             # (C, CH)
        x_t = jnp.sum(jnp.where(sel, x, 0.0), axis=0, keepdims=True)
        e_t = jnp.sum(jnp.where(sel, e, 0.0), axis=0, keepdims=True)

        logpt = x_t - m - jnp.log(sum_e)                           # (1, CH)
        pt = e_t / sum_e                                           # (1, CH)

        # alpha[target] with -1 folded in (compile-time constants).
        if all_alpha_equal:
            scaled = jnp.float32(neg_alpha[0]) * logpt
        else:
            at = jnp.full(logpt.shape, neg_alpha[0], jnp.float32)
            for ci in range(1, n_classes):
                at = jnp.where(t == ci, jnp.float32(neg_alpha[ci]), at)
            scaled = at * logpt

        if g == 0.0:
            loss = scaled
        elif g.is_integer() and 0 < int(g) <= 8:
            one_minus_pt = 1.0 - pt
            w = one_minus_pt
            for _ in range(int(g) - 1):
                w = w * one_minus_pt
            loss = w * scaled
        else:
            loss = jnp.maximum(1.0 - pt, 0.0) ** g * scaled

        if ragged:
            valid = (base + off + col) < hw
            loss = jnp.where(valid, loss, 0.0)
        return carry + loss

    zero = jnp.zeros((1, chunk), jnp.float32)
    if n_chunks == 1:
        part = chunk_body(0, zero)
    else:
        part = jax.lax.fori_loop(0, n_chunks, chunk_body, zero)

    # One small lane->sublane relayout + reduce per grid step.
    acc_ref[...] += jnp.sum(part.reshape(chunk // 128, 128), axis=0,
                            keepdims=True)

    @pl.when(j == n_j - 1)
    def _():
        out_ref[...] = acc_ref[...]


def focal_loss(target, input2, *, gamma=0.0, alpha=None, size_average=True,
               tile_cols=None, chunk=None, n_split=None):
    """target: (B, H, W) int class ids;  input2: (B, C, H, W) logits (NCHW)."""
    B, C, H, W = input2.shape
    HW = H * W

    # NCHW-native: collapsing the trailing spatial dims is free (no transpose,
    # no extra HBM pass).  Matches view(B,C,-1).transpose(1,2).view(-1,C).
    logits = input2.reshape(B, C, HW)
    tgt = target.reshape(B, 1, HW).astype(jnp.int32)

    # --- alpha -> negated compile-time constants (fold the loss's -1). ------
    if alpha is None:
        neg_alpha = tuple([-1.0] * C)
    elif isinstance(alpha, (float, int)):
        assert C == 2, "scalar alpha implies 2 classes"
        neg_alpha = (-float(alpha), -(1.0 - float(alpha)))
    else:
        vals = [float(v) for v in np.asarray(alpha, dtype=np.float32).reshape(-1)]
        assert len(vals) == C, "alpha must have one entry per class"
        neg_alpha = tuple(-v for v in vals)

    # --- tile sizing from the sublane-PADDED, double-buffered footprint. ----
    def _round_up(a, b):
        return (a + b - 1) // b * b

    itemsize = jnp.dtype(input2.dtype).itemsize
    logit_bytes_per_col = _round_up(C, max(1, 32 // itemsize)) * itemsize
    tgt_bytes_per_col = 8 * 4                       # int32 (1,tc) pads to 8 sublanes
    per_col = 2 * (logit_bytes_per_col + tgt_bytes_per_col)  # double-buffered

    if chunk is None:
        chunk = 512 if C <= 8 else (256 if C <= 32 else 128)
    if tile_cols is not None:
        tile_cols = max(128, _round_up(int(tile_cols), 128))
        chunk = min(int(chunk), tile_cols)
    chunk = max(128, _round_up(min(int(chunk), _round_up(HW, 128)), 128))

    chunks_needed = pl.cdiv(HW, chunk)
    if tile_cols is None:
        budget = 12 * 1024 * 1024                  # block buffers only; v7x-safe
        cpt = max(1, budget // (per_col * chunk))  # chunks per DMA tile
    else:
        cpt = max(1, tile_cols // chunk)
    cpt = min(cpt, chunks_needed)
    tile_cols = cpt * chunk
    n_chunks = cpt

    total_tiles = pl.cdiv(HW, tile_cols)
    ragged = (HW % tile_cols) != 0

    # Optional spatial split (feeds both v7x TensorCores when B is small).
    if n_split is None:
        n_split = 2 if (B == 1 and total_tiles >= 2 and total_tiles % 2 == 0) else 1
    n_split = max(1, int(n_split))
    if total_tiles % n_split != 0:
        n_split = 1
    n_col = total_tiles // n_split

    kernel = functools.partial(
        _focal_loss_kernel, gamma=float(gamma), neg_alpha=neg_alpha, hw=HW,
        tile_cols=tile_cols, chunk=chunk, n_chunks=n_chunks, ragged=ragged)

    partials = pl.pallas_call(
        kernel,
        out_shape=jax.ShapeDtypeStruct((B * n_split, 1, 128), jnp.float32),
        grid_spec=pltpu.PrefetchScalarGridSpec(
            num_scalar_prefetch=0,
            grid=(B, n_split, n_col),
            in_specs=[
                pl.BlockSpec((None, C, tile_cols),
                             lambda b, s, j: (b, 0, s * n_col + j)),
                pl.BlockSpec((None, 1, tile_cols),
                             lambda b, s, j: (b, 0, s * n_col + j)),
            ],
            out_specs=pl.BlockSpec((None, 1, 128),
                                   lambda b, s, j: (b * n_split + s, 0, 0)),
            scratch_shapes=[pltpu.VMEM((1, 128), jnp.float32)],
        ),
        compiler_params=pltpu.CompilerParams(
            dimension_semantics=("parallel", "parallel", "arbitrary"),
            vmem_limit_bytes=32 * 1024 * 1024),
    )(logits, tgt)

    total = jnp.sum(partials)
    if size_average:
        return total / jnp.float32(B * HW)
    return total


def _reference_focal_loss(target, input2, gamma, alpha, size_average):
    """Pure-JAX reference mirroring the PyTorch forward."""
    B, C, H, W = input2.shape
    logits = jnp.transpose(input2.reshape(B, C, H * W), (0, 2, 1)).reshape(-1, C)
    t = target.reshape(-1).astype(jnp.int32)
    logp = jax.nn.log_softmax(logits.astype(jnp.float32), axis=1)
    logpt = jnp.take_along_axis(logp, t[:, None], axis=1)[:, 0]
    pt = jnp.exp(logpt)
    if alpha is not None:
        if isinstance(alpha, (float, int)):
            a = jnp.array([alpha, 1.0 - alpha], jnp.float32)
        else:
            a = jnp.asarray(alpha, jnp.float32)
        logpt = logpt * a[t]
    loss = -1.0 * (1.0 - pt) ** gamma * logpt
    return loss.mean() if size_average else loss.sum()


if __name__ == "__main__":
    key = jax.random.PRNGKey(0)
    k1, k2, k3, k4, k5, k6 = jax.random.split(key, 6)

    # Test 1: list alpha, integer gamma, mean reduction (matches spec usage).
    B, C, H, W = 2, 4, 16, 16
    logits_nchw = jax.random.normal(k1, (B, C, H, W), jnp.float32)
    target = jax.random.randint(k2, (B, H, W), 0, C, jnp.int32)
    gamma = 2.0
    alpha = [0.1, 0.2, 0.3, 0.4]
    out = focal_loss(target, logits_nchw, gamma=gamma, alpha=alpha,
                     size_average=True)
    out = jax.block_until_ready(out)
    ref = _reference_focal_loss(target, logits_nchw, gamma, alpha, True)
    ref = jax.block_until_ready(ref)
    assert jnp.allclose(out, ref, rtol=1e-5, atol=1e-5), (out, ref)

    # Test 2: ragged spatial extent (garbage padded lanes only masked at the
    # end), no alpha, fractional gamma, sum reduction.
    B2, C2, H2, W2 = 2, 4, 20, 20            # HW = 400, tile_cols=256 -> ragged
    logits2 = jax.random.normal(k3, (B2, C2, H2, W2), jnp.float32)
    target2 = jax.random.randint(k4, (B2, H2, W2), 0, C2, jnp.int32)
    out2 = focal_loss(target2, logits2, gamma=1.5, alpha=None,
                      size_average=False, tile_cols=256)
    out2 = jax.block_until_ready(out2)
    ref2 = _reference_focal_loss(target2, logits2, 1.5, None, False)
    ref2 = jax.block_until_ready(ref2)
    assert jnp.allclose(out2, ref2, rtol=1e-5, atol=1e-4), (out2, ref2)

    # Test 3: B=1 exercises the spatial-split parallel axis, multi-chunk
    # fori_loop, ragged last tile, C=3 alpha where-chain, gamma=3 chain.
    B3, C3, H3, W3 = 1, 3, 32, 40            # HW = 1280
    logits3 = jax.random.normal(k5, (B3, C3, H3, W3), jnp.float32)
    target3 = jax.random.randint(k6, (B3, H3, W3), 0, C3, jnp.int32)
    alpha3 = [0.25, 0.5, 0.25]
    out3 = focal_loss(target3, logits3, gamma=3.0, alpha=alpha3,
                      size_average=False, tile_cols=384, chunk=128)
    out3 = jax.block_until_ready(out3)
    ref3 = _reference_focal_loss(target3, logits3, 3.0, alpha3, False)
    ref3 = jax.block_until_ready(ref3)
    assert jnp.allclose(out3, ref3, rtol=1e-5, atol=1e-4), (out3, ref3)

    print("KERNEL_OK")
</pallas_src>

<mosaic_0001>
module attributes {stable_mosaic.version = 11 : i64} {
  func.func @_focal_loss_kernel(%arg0: i32, %arg1: i32, %arg2: i32, %arg3: memref<1x4x256xf32, #tpu.memory_space<vmem>>, %arg4: memref<1x1x256xi32, #tpu.memory_space<vmem>>, %arg5: memref<1x1x128xf32, #tpu.memory_space<vmem>>, %arg6: memref<1x128xf32, #tpu.memory_space<vmem>>) attributes {dimension_semantics = [#tpu.dimension_semantics<parallel>, #tpu.dimension_semantics<parallel>, #tpu.dimension_semantics<arbitrary>], iteration_bounds = array<i64: 2, 1, 1>, scalar_prefetch = 0 : i64, scratch_operands = 1 : i64, tpu.core_type = #tpu.core_type<tc>, window_params = [{transform_indices = @transform_0, window_bounds = array<i64: 1, 4, 256>}, {transform_indices = @transform_1, window_bounds = array<i64: 1, 1, 256>}, {transform_indices = @transform_2, window_bounds = array<i64: 1, 1, 128>}]} {
    %c0_i32 = arith.constant 0 : i32
    %0 = arith.cmpi eq, %arg2, %c0_i32 : i32
    %1 = arith.extui %0 : i1 to i32
    %c0_i32_0 = arith.constant 0 : i32
    %2 = arith.cmpi ne, %1, %c0_i32_0 : i32
    scf.if %2 {
      %cst_24 = arith.constant 0.000000e+00 : f32
      %58 = vector.broadcast %cst_24 : f32 to vector<1x128xf32>
      %c0_25 = arith.constant 0 : index
      %c0_26 = arith.constant 0 : index
      %59 = vector.load %arg6[%c0_25, %c0_26] : memref<1x128xf32, #tpu.memory_space<vmem>>, vector<1x128xf32>
      tpu.vector_store %arg6[%c0_25, %c0_26], %58 {strides = array<i32>} : memref<1x128xf32, #tpu.memory_space<vmem>>, vector<1x128xf32>,
    } else {
    }
    %3 = tpu.iota {dimensions = array<i32: 0>} : vector<4x256xi32>
    %cst = arith.constant 0.000000e+00 : f32
    %4 = vector.broadcast %cst : f32 to vector<1x256xf32>
    %c0 = arith.constant 0 : index
    %c0_1 = arith.constant 0 : index
    %c0_2 = arith.constant 0 : index
    %5 = vector.load %arg3[%c0, %c0_1, %c0_2] : memref<1x4x256xf32, #tpu.memory_space<vmem>>, vector<1x4x256xf32>
    %6 = vector.shape_cast %5 : vector<1x4x256xf32> to vector<4x256xf32>
    %c0_3 = arith.constant 0 : index
    %c0_4 = arith.constant 0 : index
    %c0_5 = arith.constant 0 : index
    %7 = vector.load %arg4[%c0_3, %c0_4, %c0_5] : memref<1x1x256xi32, #tpu.memory_space<vmem>>, vector<1x1x256xi32>
    %8 = vector.shape_cast %7 : vector<1x1x256xi32> to vector<1x256xi32>
    %cst_6 = arith.constant dense<0xFF800000> : vector<256xf32>
    %9 = vector.multi_reduction <maximumf>, %6, %cst_6 [0] : vector<4x256xf32> to vector<256xf32>
    %10 = vector.shape_cast %9 : vector<256xf32> to vector<1x256xf32>
    %11 = vector.broadcast %10 : vector<1x256xf32> to vector<4x256xf32>
    %12 = arith.subf %6, %11 : vector<4x256xf32>
    %13 = math.exp %12 : vector<4x256xf32>
    %cst_7 = arith.constant dense<0.000000e+00> : vector<256xf32>
    %14 = vector.multi_reduction <add>, %13, %cst_7 [0] : vector<4x256xf32> to vector<256xf32>
    %15 = vector.shape_cast %14 : vector<256xf32> to vector<1x256xf32>
    %16 = vector.broadcast %8 : vector<1x256xi32> to vector<4x256xi32>
    %17 = arith.cmpi eq, %3, %16 : vector<4x256xi32>
    %cst_8 = arith.constant 0.000000e+00 : f32
    %18 = vector.broadcast %cst_8 : f32 to vector<4x256xf32>
    %19 = arith.select %17, %6, %18 : vector<4x256xi1>, vector<4x256xf32>
    %cst_9 = arith.constant dense<0.000000e+00> : vector<256xf32>
    %20 = vector.multi_reduction <add>, %19, %cst_9 [0] : vector<4x256xf32> to vector<256xf32>
    %21 = vector.shape_cast %20 : vector<256xf32> to vector<1x256xf32>
    %cst_10 = arith.constant 0.000000e+00 : f32
    %22 = vector.broadcast %cst_10 : f32 to vector<4x256xf32>
    %23 = arith.select %17, %13, %22 : vector<4x256xi1>, vector<4x256xf32>
    %cst_11 = arith.constant dense<0.000000e+00> : vector<256xf32>
    %24 = vector.multi_reduction <add>, %23, %cst_11 [0] : vector<4x256xf32> to vector<256xf32>
    %25 = vector.shape_cast %24 : vector<256xf32> to vector<1x256xf32>
    %26 = arith.subf %21, %10 : vector<1x256xf32>
    %27 = math.log %15 : vector<1x256xf32>
    %28 = arith.subf %26, %27 : vector<1x256xf32>
    %29 = arith.divf %25, %15 : vector<1x256xf32>
    %cst_12 = arith.constant -1.000000e-01 : f32
    %30 = vector.broadcast %cst_12 : f32 to vector<1x256xf32>
    %c1_i32 = arith.constant 1 : i32
    %31 = vector.broadcast %c1_i32 : i32 to vector<1x256xi32>
    %32 = arith.cmpi eq, %8, %31 : vector<1x256xi32>
    %cst_13 = arith.constant -2.000000e-01 : f32
    %33 = vector.broadcast %cst_13 : f32 to vector<1x256xf32>
    %34 = arith.select %32, %33, %30 : vector<1x256xi1>, vector<1x256xf32>
    %c2_i32 = arith.constant 2 : i32
    %35 = vector.broadcast %c2_i32 : i32 to vector<1x256xi32>
    %36 = arith.cmpi eq, %8, %35 : vector<1x256xi32>
    %cst_14 = arith.constant -3.000000e-01 : f32
    %37 = vector.broadcast %cst_14 : f32 to vector<1x256xf32>
    %38 = arith.select %36, %37, %34 : vector<1x256xi1>, vector<1x256xf32>
    %c3_i32 = arith.constant 3 : i32
    %39 = vector.broadcast %c3_i32 : i32 to vector<1x256xi32>
    %40 = arith.cmpi eq, %8, %39 : vector<1x256xi32>
    %cst_15 = arith.constant -4.000000e-01 : f32
    %41 = vector.broadcast %cst_15 : f32 to vector<1x256xf32>
    %42 = arith.select %40, %41, %38 : vector<1x256xi1>, vector<1x256xf32>
    %43 = arith.mulf %42, %28 : vector<1x256xf32>
    %cst_16 = arith.constant 1.000000e+00 : f32
    %44 = vector.broadcast %cst_16 : f32 to vector<1x256xf32>
    %45 = arith.subf %44, %29 : vector<1x256xf32>
    %46 = arith.mulf %45, %45 : vector<1x256xf32>
    %47 = arith.mulf %46, %43 : vector<1x256xf32>
    %48 = arith.addf %4, %47 : vector<1x256xf32>
    %c0_17 = arith.constant 0 : index
    %c0_18 = arith.constant 0 : index
    %49 = vector.load %arg6[%c0_17, %c0_18] : memref<1x128xf32, #tpu.memory_space<vmem>>, vector<1x128xf32>
    %50 = vector.shape_cast %48 : vector<1x256xf32> to vector<2x128xf32>
    %cst_19 = arith.constant dense<0.000000e+00> : vector<128xf32>
    %51 = vector.multi_reduction <add>, %50, %cst_19 [0] : vector<2x128xf32> to vector<128xf32>
    %52 = vector.shape_cast %51 : vector<128xf32> to vector<1x128xf32>
    %53 = arith.addf %49, %52 : vector<1x128xf32>
    %c0_20 = arith.constant 0 : index
    %c0_21 = arith.constant 0 : index
    %54 = vector.load %arg6[%c0_20, %c0_21] : memref<1x128xf32, #tpu.memory_space<vmem>>, vector<1x128xf32>
    tpu.vector_store %arg6[%c0_20, %c0_21], %53 {strides = array<i32>} : memref<1x128xf32, #tpu.memory_space<vmem>>, vector<1x128xf32>,
    %c0_i32_22 = arith.constant 0 : i32
    %55 = arith.cmpi eq, %arg2, %c0_i32_22 : i32
    %56 = arith.extui %55 : i1 to i32
    %c0_i32_23 = arith.constant 0 : i32
    %57 = arith.cmpi ne, %56, %c0_i32_23 : i32
    scf.if %57 {
      %c0_24 = arith.constant 0 : index
      %c0_25 = arith.constant 0 : index
      %58 = vector.load %arg6[%c0_24, %c0_25] : memref<1x128xf32, #tpu.memory_space<vmem>>, vector<1x128xf32>
      %c0_26 = arith.constant 0 : index
      %c0_27 = arith.constant 0 : index
      %c0_28 = arith.constant 0 : index
      %59 = vector.load %arg5[%c0_26, %c0_27, %c0_28] : memref<1x1x128xf32, #tpu.memory_space<vmem>>, vector<1x1x128xf32>
      %60 = vector.shape_cast %59 : vector<1x1x128xf32> to vector<1x128xf32>
      %61 = vector.shape_cast %58 : vector<1x128xf32> to vector<1x1x128xf32>
      tpu.vector_store %arg5[%c0_26, %c0_27, %c0_28], %61 {strides = array<i32>} : memref<1x1x128xf32, #tpu.memory_space<vmem>>, vector<1x1x128xf32>,
    } else {
    }
    return
  }
  func.func @transform_0(%arg0: i32, %arg1: i32, %arg2: i32) -> (i32, i32, i32) {
    %c1_i32 = arith.constant 1 : i32
    %0 = arith.muli %arg1, %c1_i32 : i32
    %1 = arith.addi %0, %arg2 : i32
    %c0_i32 = arith.constant 0 : i32
    %c0_i32_0 = arith.constant 0 : i32
    return %arg0, %c0_i32, %1 : i32, i32, i32
  }
  func.func @transform_1(%arg0: i32, %arg1: i32, %arg2: i32) -> (i32, i32, i32) {
    %c1_i32 = arith.constant 1 : i32
    %0 = arith.muli %arg1, %c1_i32 : i32
    %1 = arith.addi %0, %arg2 : i32
    %c0_i32 = arith.constant 0 : i32
    %c0_i32_0 = arith.constant 0 : i32
    return %arg0, %c0_i32, %1 : i32, i32, i32
  }
  func.func @transform_2(%arg0: i32, %arg1: i32, %arg2: i32) -> (i32, i32, i32) {
    %c1_i32 = arith.constant 1 : i32
    %0 = arith.muli %arg0, %c1_i32 : i32
    %1 = arith.addi %0, %arg1 : i32
    %c0_i32 = arith.constant 0 : i32
    %c0_i32_0 = arith.constant 0 : i32
    %c0_i32_1 = arith.constant 0 : i32
    return %1, %c0_i32, %c0_i32_0 : i32, i32, i32
  }
}

</mosaic_0001>

<llo_original>
// kernel: tpu_custom_call.1
$region0: #{tpu_custom_call.1}
  #allocation0 [shape = 'u32[]', space=smem, size = 0x4, offset = 0x4, fixed_abs, tag = 'smem constant byte address 0x4 - core index']
  #allocation1 [shape = 'u32[72,128]{1,0:T(1,128)}', space=vmem, size = 0x9000, scoped, tag = 'internal scratch']
  #allocation2 [shape = 'f32[1,128]{1,0:T(1,128)}', space=vmem, size = 0x200, scoped, tag = 'scratch operand']
  %s0 = inlined_call_operand.hbm [shape: f32[2,4,256], index: 0, kind: input, shape index: {}]
  %s1 = inlined_call_operand.hbm [shape: s32[2,1,256], index: 1, kind: input, shape index: {}]
  %s2 = inlined_call_operand.hbm [shape: f32[2,1,128], index: 2, kind: output, shape index: {}]
  %s3 = sld [smem:[#allocation0]]
  $region57: #{tpu_custom_call.1} parent=0
    _
  %s5 = ssub.s32 1, %s3
  %s6 = scalar_select 0, %s5, %s3
  $region1: #{tpu_custom_call.1} parent=0
    #allocation3 [shape = 'u8[8192]{0}', space=vmem, size = 0x2000, scoped, tag = 'input window, operand 0']
    #allocation4 [shape = 's32[2]{0}', space=sflag, size = 0x8, scoped, tag = 'scoped memory for tpu_custom_call.1']
    #allocation5 [shape = 's32[2]{0}', space=sflag, size = 0x8, scoped, tag = 'scoped memory for tpu_custom_call.1']
    #allocation6 [shape = 'u8[2048]{0}', space=vmem, size = 0x800, scoped, tag = 'input window, operand 1']
    #allocation7 [shape = 's32[2]{0}', space=sflag, size = 0x8, scoped, tag = 'scoped memory for tpu_custom_call.1']
    #allocation8 [shape = 'u8[1024]{0}', space=vmem, size = 0x400, scoped, tag = 'output window, operand 0']
    %7 = vsyncpa [#allocation4], 0
    %s8 = scalar_lea.sflag [#allocation4], 1
    %9 = vsyncpa %s8, 0
    %10 = vsyncpa [#allocation7], 0
    %s11 = scalar_lea.sflag [#allocation7], 1
    %12 = vsyncpa %s11, 0
    %13 = vsyncpa [#allocation5], 0
    %s14 = scalar_lea.sflag [#allocation5], 1
    %15 = vsyncpa %s14, 0
    loop: start=0, step=1, limit=4
    $region2: #{tpu_custom_call.1} parent=1 // loop_pre_header
      _
    $region3: #{tpu_custom_call.1} parent=1 // loop_header
      %s17 = sphi 0, %s21
      %p18 = scmp.ge.s32.totalorder %s17, 4
      %s24 = sphi 0, %s43
      %s25 = sphi 0, %s39
      %s26 = sphi 0, %s35
      %s27 = sphi 0, %s24
      %s28 = sphi 0, %s25
      %s29 = sphi 0, %s26
      %s30 = sphi 0, %s27
      %s31 = sphi 0, %s28
      %s32 = sphi 0, %s29
      %s50 = sphi 0, %s52
      %s53 = sphi 0, %s50
      %s54 = sphi 0, %s53
      %s70 = sphi 0, %s54
      %s80 = sphi 0, %s82
      %s83 = sphi 0, %s80
      %s84 = sphi 0, %s83
      %s100 = sphi 0, %s84
      %s108 = sphi 0, %s110
      %s111 = sphi 0, %s108
      %s112 = sphi 0, %s111
      %s128 = sphi 0, %s112
    $region4: #{tpu_custom_call.1} parent=1 // loop_header_branch
      %20 = sbr.rel (%p18) target = $region8
    $region5: #{tpu_custom_call.1} parent=1 // loop_body
      %s22 = ssub.s32 %s17, 1
      %s23 = ssub.s32 %s17, 2
      %s33 = sadd.s32 1, %s26
      %p34 = scmp.ge.s32.totalorder %s33, 1
      %s35 = scalar_select %p34, 0, %s33
      %s36 = sadd.s32 1, %s25
      %s37 = scalar_select %p34, %s36, %s25
      %p38 = scmp.ge.s32.totalorder %s37, 1
      %s39 = scalar_select %p38, 0, %s37
      %s40 = sadd.s32 1, %s24
      %s41 = scalar_select %p38, %s40, %s24
      %p42 = scmp.ge.s32.totalorder %s41, 2
      %s43 = scalar_select %p42, 0, %s41
      %s44 = sadd.s32 %s25, %s26
      %s45 = sadd.s32 %s39, %s35
      %s46 = ssub.s32 %s24, %s43
      %s47 = ssub.s32 %s44, %s45
      %s48 = sor.u32 %s46, %s47
      %p49 = scmp.eq.s32.totalorder %s48, 0
      %s51 = sadd.s32 %s50, 1
      %s52 = scalar_select %p49, %s50, %s51
      %p55 = pneg %p49
      %p56 = scmp.eq.s32.totalorder %s17, 1
      %p57 = por %p55, %p56
      %p58 = scmp.ne.s32.totalorder %s50, %s53
      %p59 = scmp.eq.s32.totalorder %s17, 0
      %p60 = por %p58, %p59
      %p61 = scmp.ne.s32.totalorder %s50, %s53
      %p62 = scmp.eq.s32.totalorder %s22, 1
      %p63 = por %p61, %p62
      %p64 = scmp.ne.s32.totalorder %s53, %s54
      %p65 = scmp.eq.s32.totalorder %s22, 0
      %p66 = por %p64, %p65
      %p67 = scmp.ne.s32.totalorder %s53, %s54
      %p68 = scmp.eq.s32.totalorder %s23, 1
      %p69 = por %p67, %p68
      %p71 = scmp.ne.s32.totalorder %s54, %s70
      %p72 = scmp.eq.s32.totalorder %s23, 0
      %p73 = por %p71, %p72
      %s74 = sadd.s32 %s25, %s26
      %s75 = sadd.s32 %s39, %s35
      %s76 = ssub.s32 %s24, %s43
      %s77 = ssub.s32 %s74, %s75
      %s78 = sor.u32 %s76, %s77
      %p79 = scmp.eq.s32.totalorder %s78, 0
      %s81 = sadd.s32 %s80, 1
      %s82 = scalar_select %p79, %s80, %s81
      %p85 = pneg %p79
      %p86 = scmp.eq.s32.totalorder %s17, 1
      %p87 = por %p85, %p86
      %p88 = scmp.ne.s32.totalorder %s80, %s83
      %p89 = scmp.eq.s32.totalorder %s17, 0
      %p90 = por %p88, %p89
      %p91 = scmp.ne.s32.totalorder %s80, %s83
      %p92 = scmp.eq.s32.totalorder %s22, 1
      %p93 = por %p91, %p92
      %p94 = scmp.ne.s32.totalorder %s83, %s84
      %p95 = scmp.eq.s32.totalorder %s22, 0
      %p96 = por %p94, %p95
      %p97 = scmp.ne.s32.totalorder %s83, %s84
      %p98 = scmp.eq.s32.totalorder %s23, 1
      %p99 = por %p97, %p98
      %p101 = scmp.ne.s32.totalorder %s84, %s100
      %p102 = scmp.eq.s32.totalorder %s23, 0
      %p103 = por %p101, %p102
      %s104 = sadd.s32 %s24, %s25
      %s105 = sadd.s32 %s43, %s39
      %s106 = ssub.s32 %s104, %s105
      %p107 = scmp.eq.s32.totalorder %s106, 0
      %s109 = sadd.s32 %s108, 1
      %s110 = scalar_select %p107, %s108, %s109
      %p113 = pneg %p107
      %p114 = scmp.eq.s32.totalorder %s17, 1
      %p115 = por %p113, %p114
      %p116 = scmp.ne.s32.totalorder %s108, %s111
      %p117 = scmp.eq.s32.totalorder %s17, 0
      %p118 = por %p116, %p117
      %p119 = scmp.ne.s32.totalorder %s108, %s111
      %p120 = scmp.eq.s32.totalorder %s22, 1
      %p121 = por %p119, %p120
      %p122 = scmp.ne.s32.totalorder %s111, %s112
      %p123 = scmp.eq.s32.totalorder %s22, 0
      %p124 = por %p122, %p123
      %p125 = scmp.ne.s32.totalorder %s111, %s112
      %p126 = scmp.eq.s32.totalorder %s23, 1
      %p127 = por %p125, %p126
      %p129 = scmp.ne.s32.totalorder %s112, %s128
      %p130 = scmp.eq.s32.totalorder %s23, 0
      %p131 = por %p129, %p130
      %p132 = scmp.le.s32.totalorder 1, %s17
      %p133 = scmp.lt.s32.totalorder %s17, 3
      %p134 = pnand %p132, %p133
      %p135 = pneg %p134
      // Predicated region
      $region9: #{tpu_custom_call.1} parent=5 // pred_check
        _
      $region10: #{tpu_custom_call.1} parent=5 // pred_check_branch
        %137 = sbr.rel (%p134) target = $region12
      $region11: #{tpu_custom_call.1} parent=5 // pred_region
        %s138 = ssub.s32 %s17, 1
      $region12: #{tpu_custom_call.1} parent=5 // pred_fallthru
        _
      %p139 = scmp.lt.s32.totalorder %s17, 2
      // Predicated region
      $region13: #{tpu_custom_call.1} parent=5 // pred_check
        %p140 = pneg %p139
      $region14: #{tpu_custom_call.1} parent=5 // pred_check_branch
        %142 = sbr.rel (%p140) target = $region16
      $region15: #{tpu_custom_call.1} parent=5 // pred_region
        // Predicated region
        $region17: #{tpu_custom_call.1} parent=15 // pred_check
          %p143 = pneg %p60
        $region18: #{tpu_custom_call.1} parent=15 // pred_check_branch
          %145 = sbr.rel (%p143) target = $region20
        $region19: #{tpu_custom_call.1} parent=15 // pred_region
          %s146 = sand.u32 %s50, 1
          %s147 = scalar_lea.sflag [#allocation4], %s146
          %s148 = sand.u32 %s50, 1
          %s149 = smul.addr %s148, 8
          %s150 = scalar_lea.vmem [#allocation3], %s149
          %s151 = sadd.s32 %s25, %s26
          %s152 = smul.u32 2, %s151
          %154 = vsyncadd %s147, 0
          %s155 = smul.addr %s24, 2
          %s156 = sadd.s32 %s152, %s155
          %s157 = smul.addr %s156, 4
          %s158 = scalar_lea.hbm %s0, %s157
          %s160 = sshll.u32 %s158, 4
          %s161 = int_to_ptr.hbm [resolvable:$true] %s160
          %s162 = sshll.u32 %s150, 4
          %s163 = int_to_ptr.vmem [resolvable:$true] %s162
          %165 = dma.hbm_to_vmem [thread:$0]  %s161, 128, %s163, %s147
        $region20: #{tpu_custom_call.1} parent=15 // pred_fallthru
          _
        // Predicated region
        $region21: #{tpu_custom_call.1} parent=15 // pred_check
          %p166 = pneg %p90
        $region22: #{tpu_custom_call.1} parent=15 // pred_check_branch
          %168 = sbr.rel (%p166) target = $region24
        $region23: #{tpu_custom_call.1} parent=15 // pred_region
          %s169 = sand.u32 %s80, 1
          %s170 = scalar_lea.sflag [#allocation7], %s169
          %s171 = sand.u32 %s80, 1
          %s172 = smul.addr %s171, 2
          %s173 = scalar_lea.vmem [#allocation6], %s172
          %s174 = sadd.s32 %s25, %s26
          %s175 = smul.u32 2, %s174
          %177 = vsyncadd %s170, 0
          %s178 = smul.addr %s24, 2
          %s179 = sadd.s32 %s175, %s178
          %s180 = scalar_lea.hbm %s1, %s179
          %s182 = sshll.u32 %s180, 4
          %s183 = int_to_ptr.hbm [resolvable:$true] %s182
          %s184 = sshll.u32 %s173, 4
          %s185 = int_to_ptr.vmem [resolvable:$true] %s184
          %187 = dma.hbm_to_vmem [thread:$0]  %s183, 32, %s185, %s170
        $region24: #{tpu_custom_call.1} parent=15 // pred_fallthru
          _
      $region16: #{tpu_custom_call.1} parent=5 // pred_fallthru
        _
      %p188 = scmp.le.s32.totalorder 1, %s17
      %p189 = scmp.lt.s32.totalorder %s17, 3
      %p190 = pnand %p188, %p189
      %p191 = pneg %p190
      // Predicated region
      $region25: #{tpu_custom_call.1} parent=5 // pred_check
        _
      $region26: #{tpu_custom_call.1} parent=5 // pred_check_branch
        %193 = sbr.rel (%p190) target = $region28
      $region27: #{tpu_custom_call.1} parent=5 // pred_region
        %s194 = ssub.s32 %s17, 1
        %s195 = sand.u32 %s53, 1
        %s196 = scalar_lea.sflag [#allocation4], %s195
        %s197 = sand.u32 %s53, 1
        %s198 = smul.addr %s197, 8
        %s199 = scalar_lea.vmem [#allocation3], %s198
        // Predicated region
        $region29: #{tpu_custom_call.1} parent=27 // pred_check
          %p200 = pneg %p66
        $region30: #{tpu_custom_call.1} parent=27 // pred_check_branch
          %202 = sbr.rel (%p200) target = $region32
        $region31: #{tpu_custom_call.1} parent=27 // pred_region
          %204 = dma.done %s196, 128
        $region32: #{tpu_custom_call.1} parent=27 // pred_fallthru
          _
        %s205 = sand.u32 %s83, 1
        %s206 = scalar_lea.sflag [#allocation7], %s205
        %s207 = sand.u32 %s83, 1
        %s208 = smul.addr %s207, 2
        %s209 = scalar_lea.vmem [#allocation6], %s208
        // Predicated region
        $region33: #{tpu_custom_call.1} parent=27 // pred_check
          %p210 = pneg %p96
        $region34: #{tpu_custom_call.1} parent=27 // pred_check_branch
          %212 = sbr.rel (%p210) target = $region36
        $region35: #{tpu_custom_call.1} parent=27 // pred_region
          %214 = dma.done %s206, 32
        $region36: #{tpu_custom_call.1} parent=27 // pred_fallthru
          _
        %s215 = sand.u32 %s53, 1
        %s216 = scalar_lea.sflag [#allocation4], %s215
        %s217 = sand.u32 %s53, 1
        %s218 = smul.addr %s217, 8
        %s219 = scalar_lea.vmem [#allocation3], %s218
        %p220 = pneg %p66
        %p221 = pneg %p63
        %s222 = sand.u32 %s83, 1
        %s223 = scalar_lea.sflag [#allocation7], %s222
        %s224 = sand.u32 %s83, 1
        %s225 = smul.addr %s224, 2
        %s226 = scalar_lea.vmem [#allocation6], %s225
        %p227 = pneg %p96
        %p228 = pneg %p93
        %p229 = pneg %p124
        %p230 = pneg %p121
        %s231 = sand.u32 %s111, 1
        %s232 = scalar_lea.sflag [#allocation5], %s231
        %s233 = sand.u32 %s111, 1
        %s234 = scalar_lea.vmem [#allocation8], %s233
        %s235 = sadd.s32 %s28, %s29
        %s236 = smul.u32 2, %s235
        %s237 = sadd.s32 %s28, %s29
        %s238 = smul.u32 2, %s237
        %s239 = sadd.s32 %s27, %s28
        %p240 = scmp.eq.s32.totalorder %s29, 0
        // Predicated region
        $region37: #{tpu_custom_call.1} parent=27 // pred_check
          %p241 = pneg %p240
        $region38: #{tpu_custom_call.1} parent=27 // pred_check_branch
          %243 = sbr.rel (%p241) target = $region40
        $region39: #{tpu_custom_call.1} parent=27 // pred_region
          %244 = vst [vmem:[#allocation2] sm:$0x1] 0.0
        $region40: #{tpu_custom_call.1} parent=27 // pred_fallthru
          _
        %v245 = vlaneseq
        %v246 = vshrl.u32 %v245, 7
        %v247 = vld [vmem:[%s199] sm:$0xff]
        %v248 = vld [vmem:[%s209] sm:$0x3]
        %250 = vst [vmem:[#allocation1] ss:$2 sm:$0xff] %v247
        %v251 = vld.sshfl [vmem:[#allocation1] sm:$0xff pattern:$0x75316420]
        %v252 = vld.sshfl [vmem:[#allocation1 + $0x8] sm:$0xff pattern:$0x75316420]
        %vm255 = vcmask 1043456
        %v256 = vsel %vm255, %v251, -inf
        %v257 = vrot.slane %v256, 4
        %v258 = vmax.f32 %v256, %v257
        %v259 = vrot.slane %v258, 2
        %v260 = vmax.f32 %v258, %v259
        %v261 = vrot.slane %v260, 1
        %v262 = vmax.f32 %v260, %v261
        %v263 = vsel %vm255, %v252, -inf
        %v264 = vrot.slane %v263, 4
        %v265 = vmax.f32 %v263, %v264
        %v266 = vrot.slane %v265, 2
        %v267 = vmax.f32 %v265, %v266
        %v268 = vrot.slane %v267, 1
        %v269 = vmax.f32 %v267, %v268
        %v272 = vrot.slane %v269, 4
        %v273 = vsel %vm255, %v262, %v272
        %v275 = vsub.f32 %v247, %v273
        %v276 = vmul.f32 %v275, 1.442695
        %v277 = vpow.pop %v276
        %279 = vst [vmem:[#allocation1] ss:$2 sm:$0xff] %v277
        %v280 = vld.sshfl [vmem:[#allocation1] sm:$0xff pattern:$0x75316420]
        %v281 = vld.sshfl [vmem:[#allocation1 + $0x8] sm:$0xff pattern:$0x75316420]
        %v284 = vsel %vm255, %v280, 0.0
        %v285 = vrot.slane %v284, 4
        %v286 = vadd.f32 %v284, %v285
        %v287 = vrot.slane %v286, 2
        %v288 = vadd.f32 %v286, %v287
        %v289 = vrot.slane %v288, 1
        %v290 = vadd.f32 %v288, %v289
        %v291 = vsel %vm255, %v281, 0.0
        %v292 = vrot.slane %v291, 4
        %v293 = vadd.f32 %v291, %v292
        %v294 = vrot.slane %v293, 2
        %v295 = vadd.f32 %v293, %v294
        %v296 = vrot.slane %v295, 1
        %v297 = vadd.f32 %v295, %v296
        %v298 = vperm.slane %v248, 0
        %v299 = vperm.slane %v248, 1
        %vm300 = vcmp.eq.s32.totalorder %v246, %v298
        %vm301 = vcmp.eq.s32.totalorder %v246, %v299
        %302 = vst [vmem:[#allocation1] ss:$2 sm:$0xff] %v247
        %v303 = vld.sshfl [vmem:[#allocation1] sm:$0xff pattern:$0x75316420]
        %v304 = vld.sshfl [vmem:[#allocation1 + $0x8] sm:$0xff pattern:$0x75316420]
        %v307 = vsel %vm300, %v303, 0.0
        %v308 = vsel %vm301, %v304, 0.0
        %v309 = vsel %vm255, %v307, 0.0
        %v310 = vrot.slane %v309, 4
        %v311 = vadd.f32 %v309, %v310
        %v312 = vrot.slane %v311, 2
        %v313 = vadd.f32 %v311, %v312
        %v314 = vrot.slane %v313, 1
        %v315 = vadd.f32 %v313, %v314
        %v316 = vsel %vm255, %v308, 0.0
        %v317 = vrot.slane %v316, 4
        %v318 = vadd.f32 %v316, %v317
        %v319 = vrot.slane %v318, 2
        %v320 = vadd.f32 %v318, %v319
        %v321 = vrot.slane %v320, 1
        %v322 = vadd.f32 %v320, %v321
        %323 = vst [vmem:[#allocation1] ss:$2 sm:$0xff] %v277
        %v324 = vld.sshfl [vmem:[#allocation1] sm:$0xff pattern:$0x75316420]
        %v325 = vld.sshfl [vmem:[#allocation1 + $0x8] sm:$0xff pattern:$0x75316420]
        %v328 = vsel %vm300, %v324, 0.0
        %v329 = vsel %vm301, %v325, 0.0
        %v330 = vsel %vm255, %v328, 0.0
        %v331 = vrot.slane %v330, 4
        %v332 = vadd.f32 %v330, %v331
        %v333 = vrot.slane %v332, 2
        %v334 = vadd.f32 %v332, %v333
        %v335 = vrot.slane %v334, 1
        %v336 = vadd.f32 %v334, %v335
        %v337 = vsel %vm255, %v329, 0.0
        %v338 = vrot.slane %v337, 4
        %v339 = vadd.f32 %v337, %v338
        %v340 = vrot.slane %v339, 2
        %v341 = vadd.f32 %v339, %v340
        %v342 = vrot.slane %v341, 1
        %v343 = vadd.f32 %v341, %v342
        %v344 = vsub.f32 %v315, %v262
        %v345 = vsub.f32 %v322, %v269
        %v346 = vlog2.pop %v290
        %v347 = vmul.f32 %v346, 0.6931472
        %v348 = vlog2.pop %v297
        %v349 = vmul.f32 %v348, 0.6931472
        %v350 = vsub.f32 %v344, %v347
        %v351 = vsub.f32 %v345, %v349
        %v352 = vrcp.pop %v290
        %v353 = vmul.f32 %v290, %v352
        %v354 = vsub.f32 1.0, %v353
        %v355 = vmul.f32 %v352, %v354
        %v356 = vadd.f32 %v352, %v355
        %vm357 = vweird.f32 %v290
        %vm358 = vweird.f32 %v352
        %vm359 = vmor %vm357, %vm358
        %v360 = vsel %vm359, %v352, %v356
        %v361 = vand.u32 2147483647, %v290
        %vm362 = vcmp.eq.f32.partialorder %v361, 8.507059e+37
        %v363 = vand.u32 %v290, 2147483648
        %v364 = vor.u32 1.1754944e-38, %v363
        %v365 = vsel %vm362, %v364, %v360
        %v366 = vmul.f32 %v336, %v365
        %v367 = vrcp.pop %v297
        %v368 = vmul.f32 %v297, %v367
        %v369 = vsub.f32 1.0, %v368
        %v370 = vmul.f32 %v367, %v369
        %v371 = vadd.f32 %v367, %v370
        %vm372 = vweird.f32 %v297
        %vm373 = vweird.f32 %v367
        %vm374 = vmor %vm372, %vm373
        %v375 = vsel %vm374, %v367, %v371
        %v376 = vand.u32 2147483647, %v297
        %vm377 = vcmp.eq.f32.partialorder %v376, 8.507059e+37
        %v378 = vand.u32 %v297, 2147483648
        %v379 = vor.u32 1.1754944e-38, %v378
        %v380 = vsel %vm377, %v379, %v375
        %v381 = vmul.f32 %v343, %v380
        %vm382 = vcmp.eq.s32.totalorder %v248, 1
        %v383 = vsel %vm382, -0.2, -0.1
        %vm384 = vcmp.eq.s32.totalorder %v248, 2
        %v385 = vsel %vm384, -0.3, %v383
        %vm386 = vcmp.eq.s32.totalorder %v248, 3
        %v387 = vsel %vm386, -0.4, %v385
        %v390 = vrot.slane %v351, 7
        %vm391 = vcmask 1040384
        %v392 = vsel %vm391, %v350, %v390
        %v394 = vmul.f32 %v387, %v392
        %v395 = vsub.f32 1.0, %v366
        %v396 = vsub.f32 1.0, %v381
        %v397 = vmul.f32 %v395, %v395
        %v398 = vmul.f32 %v396, %v396
        %v400 = vperm.slane %v394, 0
        %v401 = vperm.slane %v394, 1
        %v404 = vmul.f32 %v397, %v400
        %v405 = vmul.f32 %v398, %v401
        %v406 = vadd.f32 %v404, 0.0
        %v407 = vadd.f32 %v405, 0.0
        %v408 = vld [vmem:[#allocation2] sm:$0x1]
        %v411 = vrot.slane %v407, 4
        %v412 = vsel %vm255, %v406, %v411
        %v415 = vunpack.c.l.s4 1935823168
        %v416 = vunpack.c.0.s8 %v415
        %v417 = vperm.slane %v412, %v416
        %vm418 = vcmask 1041408
        %v419 = vsel %vm418, %v417, 0.0
        %v420 = vrot.slane %v419, 4
        %v421 = vadd.f32 %v419, %v420
        %v422 = vrot.slane %v421, 2
        %v423 = vadd.f32 %v421, %v422
        %v424 = vrot.slane %v423, 1
        %v425 = vadd.f32 %v423, %v424
        %v426 = vadd.f32 %v408, %v425
        %427 = vst [vmem:[#allocation2] sm:$0x1] %v426
        // Predicated region
        $region41: #{tpu_custom_call.1} parent=27 // pred_check
          %p428 = pneg %p240
        $region42: #{tpu_custom_call.1} parent=27 // pred_check_branch
          %430 = sbr.rel (%p428) target = $region44
        $region43: #{tpu_custom_call.1} parent=27 // pred_region
          %v431 = vld [vmem:[#allocation2] sm:$0x1]
          %432 = vst [vmem:[%s234] sm:$0x1] %v431
        $region44: #{tpu_custom_call.1} parent=27 // pred_fallthru
          _
        %s433 = sand.u32 %s111, 1
        %s434 = scalar_lea.sflag [#allocation5], %s433
        %s435 = sand.u32 %s111, 1
        %s436 = scalar_lea.vmem [#allocation8], %s435
        // Predicated region
        $region45: #{tpu_custom_call.1} parent=27 // pred_check
          %p437 = pneg %p121
        $region46: #{tpu_custom_call.1} parent=27 // pred_check_branch
          %439 = sbr.rel (%p437) target = $region48
        $region47: #{tpu_custom_call.1} parent=27 // pred_region
          %s440 = sadd.s32 %s27, %s28
          %442 = vsyncadd %s434, 0
          %s443 = scalar_lea.hbm %s2, %s440
          %s445 = sshll.u32 %s436, 4
          %s446 = int_to_ptr.vmem [resolvable:$true] %s445
          %s447 = sshll.u32 %s443, 4
          %s448 = int_to_ptr.hbm [resolvable:$true] %s447
          %450 = dma.vmem_to_hbm [thread:$0]  %s446, 16, %s448, %s434
        $region48: #{tpu_custom_call.1} parent=27 // pred_fallthru
          _
      $region28: #{tpu_custom_call.1} parent=5 // pred_fallthru
        _
      %p451 = scmp.le.s32.totalorder 2, %s17
      // Predicated region
      $region49: #{tpu_custom_call.1} parent=5 // pred_check
        %p452 = pneg %p451
      $region50: #{tpu_custom_call.1} parent=5 // pred_check_branch
        %454 = sbr.rel (%p452) target = $region52
      $region51: #{tpu_custom_call.1} parent=5 // pred_region
        %s455 = ssub.s32 %s17, 2
        // Predicated region
        $region53: #{tpu_custom_call.1} parent=51 // pred_check
          %p456 = pneg %p127
        $region54: #{tpu_custom_call.1} parent=51 // pred_check_branch
          %458 = sbr.rel (%p456) target = $region56
        $region55: #{tpu_custom_call.1} parent=51 // pred_region
          %s459 = sand.u32 %s112, 1
          %s460 = scalar_lea.sflag [#allocation5], %s459
          %s461 = sand.u32 %s112, 1
          %s462 = scalar_lea.vmem [#allocation8], %s461
          %464 = dma.done %s460, 16
        $region56: #{tpu_custom_call.1} parent=51 // pred_fallthru
          _
      $region52: #{tpu_custom_call.1} parent=5 // pred_fallthru
        _
    $region6: #{tpu_custom_call.1} parent=1 // loop_footer
      %s21 = sadd.s32 1, %s17
    $region7: #{tpu_custom_call.1} parent=1 // loop_footer_branch
      %16 = sbr.rel target = $region3
    $region8: #{tpu_custom_call.1} parent=1 // loop_exit
      _
    %465 = vsyncpa [#allocation4], 1
    %s466 = scalar_lea.sflag [#allocation4], 1
    %467 = vsyncpa %s466, 1
    %468 = vsyncpa [#allocation7], 1
    %s469 = scalar_lea.sflag [#allocation7], 1
    %470 = vsyncpa %s469, 1
    %471 = vsyncpa [#allocation5], 1
    %s472 = scalar_lea.sflag [#allocation5], 1
    %473 = vsyncpa %s472, 1

</llo_original>
